<compile_context>
chip_gen: v7x
topology: tpu7x:2x2x1
jax: 0.10.0
libtpu: 0.0.40
codegen_flags: <defaults>
</compile_context>

<pallas_src>
import jax
import jax.numpy as jnp
from jax.experimental import pallas as pl
from jax.experimental.pallas import tpu as pltpu

K = 3            # MaxPool2d kernel_size == stride == 3
KK = K * K

LANE_WIDTH = 512   # lane-dense trailing dim (multiple of 128)
TILE_ROWS = 256    # sublane tile; halve if sharing VMEM with other kernels on v7x


def _cdiv(a, b):
    return -(-a // b)


def _maxpool_kernel(x_ref, o_ref):
    # x_ref: (KK, TILE_ROWS, LANE_WIDTH) -- slab kk holds window element
    #        (di, dj) = divmod(kk, K) for every flattened output position.
    # o_ref: (TILE_ROWS, LANE_WIDTH)
    vals = [x_ref[kk] for kk in range(KK)]
    # Pairwise tree reduction: depth ~4 instead of an 8-long serial max chain.
    while len(vals) > 1:
        nxt = [jnp.maximum(vals[i], vals[i + 1]) for i in range(0, len(vals) - 1, 2)]
        if len(vals) % 2:
            nxt.append(vals[-1])
        vals = nxt
    o_ref[...] = vals[0]


def maxpool2d_ceil(x, *, tile_rows=TILE_ROWS, lane_width=LANE_WIDTH):
    """MaxPool2d(kernel_size=3, ceil_mode=True) on an NCHW tensor."""
    N, C, H, W = x.shape
    Ho, Wo = _cdiv(H, K), _cdiv(W, K)
    Hp, Wp = Ho * K, Wo * K

    # Identity of max for the padding (handles float and integer dtypes).
    if jnp.issubdtype(x.dtype, jnp.floating):
        pad_val = -jnp.inf
    else:
        pad_val = jnp.iinfo(x.dtype).min

    # -- Glue (XLA): pad edge-partial windows, then gather the 9 window
    # offsets into contiguous, lane-dense slabs (KK, M), M = N*C*Ho*Wo.
    # TODO(synk): this transpose costs one extra HBM pass on a bandwidth-bound
    # op; fusing it into the kernel (stride-K sublane loads + lane compaction
    # via pltpu.roll) would cut HBM traffic further.
    xp = jnp.pad(
        x,
        ((0, 0), (0, 0), (0, Hp - H), (0, Wp - W)),
        constant_values=pad_val,
    )
    xw = (
        xp.reshape(N, C, Ho, K, Wo, K)
        .transpose(3, 5, 0, 1, 2, 4)
        .reshape(KK, N * C * Ho * Wo)
    )

    M = N * C * Ho * Wo
    R = _cdiv(M, lane_width)
    m_pad = R * lane_width
    if m_pad != M:
        xw = jnp.pad(xw, ((0, 0), (0, m_pad - M)), constant_values=pad_val)
    xw = xw.reshape(KK, R, lane_width)

    tile_r = min(tile_rows, R)   # full-dim block if R is small, else 256 (mult of 8)
    grid = (_cdiv(R, tile_r),)

    out_flat = pl.pallas_call(
        _maxpool_kernel,
        out_shape=jax.ShapeDtypeStruct((R, lane_width), x.dtype),
        grid=grid,
        in_specs=[pl.BlockSpec((KK, tile_r, lane_width), lambda r: (0, r, 0))],
        out_specs=pl.BlockSpec((tile_r, lane_width), lambda r: (r, 0)),
        compiler_params=pltpu.CompilerParams(
            dimension_semantics=("parallel",),
            vmem_limit_bytes=32 * 1024 * 1024,
        ),
    )(xw)

    # Drop row padding (free reshape of contiguous data + cheap slice).
    return out_flat.reshape(-1)[:M].reshape(N, C, Ho, Wo)


if __name__ == "__main__":
    key = jax.random.PRNGKey(0)
    # Small NCHW input consistent with a 2D maxpool module.
    x = jax.random.normal(key, (2, 4, 16, 16), dtype=jnp.float32)

    y = maxpool2d_ceil(x)
    jax.block_until_ready(y)

    # Reference (plain JAX) for the same ceil_mode semantics.
    Ho, Wo = _cdiv(16, K), _cdiv(16, K)
    xp = jnp.pad(
        x,
        ((0, 0), (0, 0), (0, Ho * K - 16), (0, Wo * K - 16)),
        constant_values=-jnp.inf,
    )
    ref = xp.reshape(2, 4, Ho, K, Wo, K).max(axis=(3, 5))

    assert y.shape == (2, 4, 6, 6), y.shape
    assert jnp.allclose(y, ref), "Pallas maxpool mismatch vs reference"
    print("KERNEL_OK")
</pallas_src>

<mosaic_0001>
module attributes {stable_mosaic.version = 11 : i64} {
  func.func @_maxpool_kernel(%arg0: i32, %arg1: memref<9x1x512xf32, #tpu.memory_space<vmem>>, %arg2: memref<1x512xf32, #tpu.memory_space<vmem>>) attributes {dimension_semantics = [#tpu.dimension_semantics<parallel>], iteration_bounds = array<i64: 1>, scalar_prefetch = 0 : i64, scratch_operands = 0 : i64, tpu.core_type = #tpu.core_type<tc>, window_params = [{transform_indices = @transform_0, window_bounds = array<i64: 9, 1, 512>}, {transform_indices = @transform_1, window_bounds = array<i64: 1, 512>}]} {
    %c0 = arith.constant 0 : index
    %c0_0 = arith.constant 0 : index
    %c0_1 = arith.constant 0 : index
    %0 = vector.load %arg1[%c0, %c0_0, %c0_1] : memref<9x1x512xf32, #tpu.memory_space<vmem>>, vector<1x1x512xf32>
    %1 = vector.shape_cast %0 : vector<1x1x512xf32> to vector<1x512xf32>
    %c1 = arith.constant 1 : index
    %c0_2 = arith.constant 0 : index
    %c0_3 = arith.constant 0 : index
    %2 = vector.load %arg1[%c1, %c0_2, %c0_3] : memref<9x1x512xf32, #tpu.memory_space<vmem>>, vector<1x1x512xf32>
    %3 = vector.shape_cast %2 : vector<1x1x512xf32> to vector<1x512xf32>
    %c2 = arith.constant 2 : index
    %c0_4 = arith.constant 0 : index
    %c0_5 = arith.constant 0 : index
    %4 = vector.load %arg1[%c2, %c0_4, %c0_5] : memref<9x1x512xf32, #tpu.memory_space<vmem>>, vector<1x1x512xf32>
    %5 = vector.shape_cast %4 : vector<1x1x512xf32> to vector<1x512xf32>
    %c3 = arith.constant 3 : index
    %c0_6 = arith.constant 0 : index
    %c0_7 = arith.constant 0 : index
    %6 = vector.load %arg1[%c3, %c0_6, %c0_7] : memref<9x1x512xf32, #tpu.memory_space<vmem>>, vector<1x1x512xf32>
    %7 = vector.shape_cast %6 : vector<1x1x512xf32> to vector<1x512xf32>
    %c4 = arith.constant 4 : index
    %c0_8 = arith.constant 0 : index
    %c0_9 = arith.constant 0 : index
    %8 = vector.load %arg1[%c4, %c0_8, %c0_9] : memref<9x1x512xf32, #tpu.memory_space<vmem>>, vector<1x1x512xf32>
    %9 = vector.shape_cast %8 : vector<1x1x512xf32> to vector<1x512xf32>
    %c5 = arith.constant 5 : index
    %c0_10 = arith.constant 0 : index
    %c0_11 = arith.constant 0 : index
    %10 = vector.load %arg1[%c5, %c0_10, %c0_11] : memref<9x1x512xf32, #tpu.memory_space<vmem>>, vector<1x1x512xf32>
    %11 = vector.shape_cast %10 : vector<1x1x512xf32> to vector<1x512xf32>
    %c6 = arith.constant 6 : index
    %c0_12 = arith.constant 0 : index
    %c0_13 = arith.constant 0 : index
    %12 = vector.load %arg1[%c6, %c0_12, %c0_13] : memref<9x1x512xf32, #tpu.memory_space<vmem>>, vector<1x1x512xf32>
    %13 = vector.shape_cast %12 : vector<1x1x512xf32> to vector<1x512xf32>
    %c7 = arith.constant 7 : index
    %c0_14 = arith.constant 0 : index
    %c0_15 = arith.constant 0 : index
    %14 = vector.load %arg1[%c7, %c0_14, %c0_15] : memref<9x1x512xf32, #tpu.memory_space<vmem>>, vector<1x1x512xf32>
    %15 = vector.shape_cast %14 : vector<1x1x512xf32> to vector<1x512xf32>
    %c8 = arith.constant 8 : index
    %c0_16 = arith.constant 0 : index
    %c0_17 = arith.constant 0 : index
    %16 = vector.load %arg1[%c8, %c0_16, %c0_17] : memref<9x1x512xf32, #tpu.memory_space<vmem>>, vector<1x1x512xf32>
    %17 = vector.shape_cast %16 : vector<1x1x512xf32> to vector<1x512xf32>
    %18 = arith.maximumf %1, %3 : vector<1x512xf32>
    %19 = arith.maximumf %5, %7 : vector<1x512xf32>
    %20 = arith.maximumf %9, %11 : vector<1x512xf32>
    %21 = arith.maximumf %13, %15 : vector<1x512xf32>
    %22 = arith.maximumf %18, %19 : vector<1x512xf32>
    %23 = arith.maximumf %20, %21 : vector<1x512xf32>
    %24 = arith.maximumf %22, %23 : vector<1x512xf32>
    %25 = arith.maximumf %24, %17 : vector<1x512xf32>
    %c0_18 = arith.constant 0 : index
    %c0_19 = arith.constant 0 : index
    %26 = vector.load %arg2[%c0_18, %c0_19] : memref<1x512xf32, #tpu.memory_space<vmem>>, vector<1x512xf32>
    tpu.vector_store %arg2[%c0_18, %c0_19], %25 {strides = array<i32>} : memref<1x512xf32, #tpu.memory_space<vmem>>, vector<1x512xf32>,
    return
  }
  func.func @transform_0(%arg0: i32) -> (i32, i32, i32) {
    %c0_i32 = arith.constant 0 : i32
    %c0_i32_0 = arith.constant 0 : i32
    %c0_i32_1 = arith.constant 0 : i32
    return %c0_i32, %arg0, %c0_i32_0 : i32, i32, i32
  }
  func.func @transform_1(%arg0: i32) -> (i32, i32) {
    %c0_i32 = arith.constant 0 : i32
    %c0_i32_0 = arith.constant 0 : i32
    return %arg0, %c0_i32 : i32, i32
  }
}

</mosaic_0001>

<llo_original>
// kernel: tpu_custom_call.1
$region0: #{tpu_custom_call.1}
  #allocation0 [shape = 'u32[]', space=smem, size = 0x4, offset = 0x4, fixed_abs, tag = 'smem constant byte address 0x4 - core index']
  #allocation1 [shape = 'u32[144,128]{1,0:T(1,128)}', space=vmem, size = 0x12000, scoped, tag = 'internal scratch']
  %s0 = inlined_call_operand.hbm [shape: f32[9,1,512], index: 0, kind: input, shape index: {}]
  %s1 = inlined_call_operand.hbm [shape: f32[1,512], index: 1, kind: output, shape index: {}]
  %s2 = sld [smem:[#allocation0]]
  $region18: #{tpu_custom_call.1} parent=0
    _
  %s4 = ssub.s32 1, %s2
  %s5 = scalar_select 0, %s4, %s2
  $region1: #{tpu_custom_call.1} parent=0
    #allocation2 [shape = 'u8[18432]{0}', space=vmem, size = 0x4800, scoped, tag = 'input window, operand 0, single buffered']
    #allocation3 [shape = 's32[1]{0}', space=sflag, size = 0x4, scoped, tag = 'scoped memory for tpu_custom_call.1']
    #allocation4 [shape = 's32[1]{0}', space=sflag, size = 0x4, scoped, tag = 'scoped memory for tpu_custom_call.1']
    #allocation5 [shape = 'u8[2048]{0}', space=vmem, size = 0x800, scoped, tag = 'output window, operand 0, single buffered']
    %6 = vsyncpa [#allocation3], 0
    %7 = vsyncpa [#allocation4], 0
    // Predicated region
    $region2: #{tpu_custom_call.1} parent=1 // pred_check
      _
    $region3: #{tpu_custom_call.1} parent=1 // pred_check_branch
      %9 = sbr.rel (0) target = $region5
    $region4: #{tpu_custom_call.1} parent=1 // pred_region
      %s11 = ssub.s32 576, 576
      %12 = vsyncadd [#allocation3], %s11
      %s13 = sshll.u32 [#allocation2], 4
      %s14 = int_to_ptr.vmem [resolvable:$true] %s13
      %19 = dma.hbm_to_vmem [thread:$0]  %s0, 576, %s14, [#allocation3], 64, 64, 4
    $region5: #{tpu_custom_call.1} parent=1 // pred_fallthru
      _
    // Predicated region
    $region6: #{tpu_custom_call.1} parent=1 // pred_check
      _
    $region7: #{tpu_custom_call.1} parent=1 // pred_check_branch
      %21 = sbr.rel (0) target = $region9
    $region8: #{tpu_custom_call.1} parent=1 // pred_region
      %22 = dma.done [#allocation3], 576
    $region9: #{tpu_custom_call.1} parent=1 // pred_fallthru
      _
    %v23 = vld [vmem:[#allocation2] sm:$0xf]
    %s24 = scalar_lea.vmem [#allocation2], 4
    %v25 = vld [vmem:[%s24] sm:$0xf]
    %s26 = scalar_lea.vmem [#allocation2], 8
    %v27 = vld [vmem:[%s26] sm:$0xf]
    %s28 = scalar_lea.vmem [#allocation2], 12
    %v29 = vld [vmem:[%s28] sm:$0xf]
    %s30 = scalar_lea.vmem [#allocation2], 16
    %v31 = vld [vmem:[%s30] sm:$0xf]
    %s32 = scalar_lea.vmem [#allocation2], 20
    %v33 = vld [vmem:[%s32] sm:$0xf]
    %s34 = scalar_lea.vmem [#allocation2], 24
    %v35 = vld [vmem:[%s34] sm:$0xf]
    %s36 = scalar_lea.vmem [#allocation2], 28
    %v37 = vld [vmem:[%s36] sm:$0xf]
    %s38 = scalar_lea.vmem [#allocation2], 32
    %v39 = vld [vmem:[%s38] sm:$0xf]
    %v40 = vmax.f32 %v23, %v25
    %v41 = vmax.f32 %v27, %v29
    %v42 = vmax.f32 %v31, %v33
    %v43 = vmax.f32 %v35, %v37
    %v44 = vmax.f32 %v40, %v41
    %v45 = vmax.f32 %v42, %v43
    %v46 = vmax.f32 %v44, %v45
    %v47 = vmax.f32 %v46, %v39
    %v48 = vlaneseq
    %vm49 = vcmp.ge.s32.totalorder %v48, 0
    %vm50 = vcmp.lt.s32.totalorder %v48, 512
    %vm51 = vmand %vm49, %vm50
    %52 = vst.msk [vmem:[#allocation5] sm:$0xf] %vm51, %v47
    // Predicated region
    $region10: #{tpu_custom_call.1} parent=1 // pred_check
      _
    $region11: #{tpu_custom_call.1} parent=1 // pred_check_branch
      %54 = sbr.rel (0) target = $region13
    $region12: #{tpu_custom_call.1} parent=1 // pred_region
      %s56 = ssub.s32 64, 64
      %57 = vsyncadd [#allocation4], %s56
      %s59 = sshll.u32 [#allocation5], 4
      %s60 = int_to_ptr.vmem [resolvable:$true] %s59
      %62 = dma.vmem_to_hbm [thread:$0]  %s60, 64, %s1, [#allocation4]
    $region13: #{tpu_custom_call.1} parent=1 // pred_fallthru
      _
    // Predicated region
    $region14: #{tpu_custom_call.1} parent=1 // pred_check
      _
    $region15: #{tpu_custom_call.1} parent=1 // pred_check_branch
      %64 = sbr.rel (0) target = $region17
    $region16: #{tpu_custom_call.1} parent=1 // pred_region
      %65 = dma.done [#allocation4], 64
    $region17: #{tpu_custom_call.1} parent=1 // pred_fallthru
      _
    %66 = vsyncpa [#allocation3], 1
    %67 = vsyncpa [#allocation4], 1

</llo_original>
